<compile_context>
chip_gen: v7x
topology: tpu7x:2x2x1
jax: 0.10.0
libtpu: 0.0.40
codegen_flags: <defaults>
</compile_context>

<pallas_src>
import math

import jax
import jax.numpy as jnp
from jax import lax
from jax.experimental import pallas as pl
from jax.experimental.pallas import tpu as pltpu


def _round_up(x, m):
    return ((x + m - 1) // m) * m


# ----------------------------- Pallas head kernel -----------------------------
def arc_head_kernel(pooled_ref, inv_norm_ref, w_ref, b_fc_ref,
                    graphme_ref, cosine_ref):
    # pooled_ref:   (BSP, C)   bf16, resident across the OUT grid.
    # inv_norm_ref: (BSP, 1)   f32, 1/||pooled||, hoisted out of the kernel.
    # w_ref:        (2, C, TN) bf16 -- [0] = normalized arc weights^T,
    #                                  [1] = fc weights^T (single DMA stream).
    # b_fc_ref:     (1, TN)    f32 bias tile.
    p = pooled_ref[...]

    # cosine = F.linear(F.normalize(x), F.normalize(W))
    #        = (x @ Wn^T) * (1/||x||),  Wn pre-normalized at init time.
    cos = lax.dot_general(p, w_ref[0], (((1,), (0,)), ((), ())),
                          preferred_element_type=jnp.float32)
    cosine_ref[...] = cos * inv_norm_ref[...]

    # graphme = self.fc(x) = x @ W_fc^T + b_fc
    gm = lax.dot_general(p, w_ref[1], (((1,), (0,)), ((), ())),
                         preferred_element_type=jnp.float32)
    graphme_ref[...] = gm + b_fc_ref[...]


def prepare_arc_head_weights(w_arc, w_fc, b_fc):
    """One-time (init-time) weight prep: normalize / pad / transpose / stack / bf16."""
    out_dim, c = w_arc.shape

    out_pad0 = _round_up(max(out_dim, 1), 128)
    # Guarantee >= 2 OUT grid steps once out_pad >= 256 (megacore on v7x);
    # tiles stay lane-aligned (multiples of 128).  TN <= 1024 keeps the
    # double-buffered weight block at <= 4 MiB (2 * 2*512*TN*2B), safe on
    # v5e/v6e/v7x scoped VMEM.
    if out_pad0 >= 256:
        tn = min(1024, _round_up(out_pad0 // 2, 128))
    else:
        tn = out_pad0
    out_pad = _round_up(out_pad0, tn)

    # ArcMargin weight L2-normalization hoisted out of the kernel (constant).
    wn = w_arc / jnp.maximum(
        jnp.sqrt(jnp.sum(w_arc * w_arc, axis=-1, keepdims=True)), 1e-12)

    def pad_rows(w):
        return jnp.zeros((out_pad, c), w.dtype).at[:out_dim].set(w)

    # Pre-transposed to (C, OUT) so each step feeds the MXU a clean (K, N)
    # tile with no in-kernel relayout; both matrices stacked so each grid step
    # is a single contiguous weight DMA.  Stored in bf16 to halve the HBM
    # weight stream; matmuls accumulate in f32.
    w_stack = jnp.stack([pad_rows(wn).T, pad_rows(w_fc).T],
                        axis=0).astype(jnp.bfloat16)
    b_pad = jnp.zeros((1, out_pad), jnp.float32).at[0, :out_dim].set(b_fc)

    return {'w_stack': w_stack, 'b_fc': b_pad,
            'out_dim': out_dim, 'out_pad': out_pad, 'tn': tn, 'c': c}


def arc_head(pooled, head):
    """pooled: (BS, 512) f32.  Returns (graphme, cosine), each (BS, OUT) f32."""
    bs, c = pooled.shape
    out_dim = head['out_dim']
    out_pad = head['out_pad']
    tn = head['tn']

    # bf16 LHS packs 16 sublanes per vreg -> pad batch to a multiple of 16.
    bsp = max(16, _round_up(bs, 16))
    pooled_p = jnp.zeros((bsp, c), jnp.float32).at[:bs].set(pooled)

    # Feature norm + bf16 cast hoisted out of the per-OUT-tile body.
    # (padded rows are exactly zero -> cos == 0 regardless of inv_norm)
    inv_norm = lax.rsqrt(jnp.maximum(
        jnp.sum(pooled_p * pooled_p, axis=-1, keepdims=True), 1e-24))
    pooled_b = pooled_p.astype(jnp.bfloat16)

    grid = (out_pad // tn,)

    cost = pl.CostEstimate(
        flops=2 * 2 * bsp * c * out_pad,
        transcendentals=0,
        bytes_accessed=(2 * out_pad * c * 2        # bf16 weight stream
                        + 2 * bsp * out_pad * 4    # two f32 outputs
                        + bsp * c * 2              # pooled (bf16)
                        + bsp * 4 + out_pad * 4))  # inv_norm + bias

    graphme, cosine = pl.pallas_call(
        arc_head_kernel,
        out_shape=(jax.ShapeDtypeStruct((bsp, out_pad), jnp.float32),
                   jax.ShapeDtypeStruct((bsp, out_pad), jnp.float32)),
        grid=grid,
        in_specs=[
            pl.BlockSpec((bsp, c), lambda j: (0, 0)),       # pooled: resident
            pl.BlockSpec((bsp, 1), lambda j: (0, 0)),       # inv_norm: resident
            pl.BlockSpec((2, c, tn), lambda j: (0, 0, j)),  # stacked weights: streamed
            pl.BlockSpec((1, tn), lambda j: (0, j)),        # bias tile
        ],
        out_specs=(pl.BlockSpec((bsp, tn), lambda j: (0, j)),
                   pl.BlockSpec((bsp, tn), lambda j: (0, j))),
        compiler_params=pltpu.CompilerParams(
            dimension_semantics=("parallel",),
            vmem_limit_bytes=32 * 1024 * 1024),
        cost_estimate=cost,
    )(pooled_b, inv_norm, head['w_stack'], head['b_fc'])

    return graphme[:bs, :out_dim], cosine[:bs, :out_dim]


# --------------------------- ResNet34 backbone (glue) --------------------------
def conv2d(x, w, stride, pad):
    # NHWC / HWIO: channels-last is the layout XLA:TPU convolutions want.
    return lax.conv_general_dilated(
        x, w, (stride, stride), [(pad, pad), (pad, pad)],
        dimension_numbers=('NHWC', 'HWIO', 'NHWC'))


def maxpool3x3s2(x):
    return lax.reduce_window(
        x, -jnp.inf, lax.max,
        (1, 3, 3, 1), (1, 2, 2, 1),
        [(0, 0), (1, 1), (1, 1), (0, 0)])


def _conv_w(key, k, cin, cout):
    fan_in = cin * k * k
    return jax.random.normal(key, (k, k, cin, cout), jnp.float32) * jnp.sqrt(2.0 / fan_in)


def init_resnet34_backbone(key):
    keys = iter(jax.random.split(key, 64))
    params = {'stem': _conv_w(next(keys), 7, 3, 64)}
    stages = []
    cin = 64
    for cout, nblocks in [(64, 3), (128, 4), (256, 6), (512, 3)]:
        blocks = []
        for b in range(nblocks):
            stride = 2 if (b == 0 and cout != 64) else 1
            w1 = _conv_w(next(keys), 3, cin, cout)
            w2 = _conv_w(next(keys), 3, cout, cout)
            wd = _conv_w(next(keys), 1, cin, cout) if (stride != 1 or cin != cout) else None
            blocks.append((w1, w2, wd, stride))
            cin = cout
        stages.append(blocks)
    params['stages'] = stages
    return params


def resnet34_features(params, x_nhwc):
    # BatchNorm layers with default-initialized affine/running stats
    # (gamma=1, beta=0, mean=0, var=1) are ~identities in eval mode and are
    # omitted under this deterministic initialization.
    h = jax.nn.relu(conv2d(x_nhwc, params['stem'], 2, 3))
    h = maxpool3x3s2(h)
    for blocks in params['stages']:
        for (w1, w2, wd, stride) in blocks:
            out = jax.nn.relu(conv2d(h, w1, stride, 1))
            out = conv2d(out, w2, 1, 1)
            sc = h if wd is None else conv2d(h, wd, stride, 0)
            h = jax.nn.relu(out + sc)
    return h  # (bs, H/32, W/32, 512), NHWC


# ------------------------------- arcModel forward ------------------------------
def init_arc_model(key, out_dim):
    kb, ka, kw, kbias = jax.random.split(key, 4)
    in_features = 512
    stdv = 1.0 / math.sqrt(in_features)      # ArcMarginProduct.reset_parameters
    bound = 1.0 / math.sqrt(in_features)     # nn.Linear default init
    w_arc = jax.random.uniform(ka, (out_dim, in_features), jnp.float32, -stdv, stdv)
    w_fc = jax.random.uniform(kw, (out_dim, in_features), jnp.float32, -bound, bound)
    b_fc = jax.random.uniform(kbias, (out_dim,), jnp.float32, -bound, bound)
    return {
        'backbone': init_resnet34_backbone(kb),
        # Kernel-ready head weights, cached ONCE at init (not every forward).
        'head': prepare_arc_head_weights(w_arc, w_fc, b_fc),
    }


def arc_model_forward(params, x_nchw):
    # Module contract is NCHW images; transpose the tiny input once to NHWC.
    x = jnp.transpose(x_nchw, (0, 2, 3, 1))
    feats = resnet34_features(params['backbone'], x)          # (bs, h, w, 512)
    # x = F.adaptive_avg_pool2d(x, 1).reshape(bs, -1)  ==  mean over spatial
    pooled = jnp.mean(feats, axis=(1, 2))                     # (bs, 512)
    graphme, metric_output = arc_head(pooled, params['head'])
    return graphme, metric_output


if __name__ == "__main__":
    key = jax.random.PRNGKey(0)
    k_params, k_x = jax.random.split(key)

    out_dim = 16
    params = init_arc_model(k_params, out_dim)

    # small NCHW image batch (bs=2, 3 channels, 64x64 -> 2x2x512 features)
    x = jax.random.normal(k_x, (2, 3, 64, 64), jnp.float32)

    graphme, metric_output = arc_model_forward(params, x)
    jax.block_until_ready((graphme, metric_output))

    assert graphme.shape == (2, out_dim)
    assert metric_output.shape == (2, out_dim)
    # raw cosine similarities (bf16 matmul, f32 norm) must lie in ~[-1, 1]
    assert bool(jnp.all(jnp.abs(metric_output) <= 1.0 + 1e-2))
    assert bool(jnp.all(jnp.isfinite(graphme)))

    print("KERNEL_OK")
</pallas_src>

<mosaic_0001>
module attributes {stable_mosaic.version = 11 : i64} {
  func.func @arc_head_kernel(%arg0: i32, %arg1: memref<16x512xbf16, #tpu.memory_space<vmem>>, %arg2: memref<16x1xf32, #tpu.memory_space<vmem>>, %arg3: memref<2x512x128xbf16, #tpu.memory_space<vmem>>, %arg4: memref<1x128xf32, #tpu.memory_space<vmem>>, %arg5: memref<16x128xf32, #tpu.memory_space<vmem>>, %arg6: memref<16x128xf32, #tpu.memory_space<vmem>>) attributes {dimension_semantics = [#tpu.dimension_semantics<parallel>], iteration_bounds = array<i64: 1>, scalar_prefetch = 0 : i64, scratch_operands = 0 : i64, tpu.core_type = #tpu.core_type<tc>, window_params = [{pipeline_mode = #tpu.pipeline_mode<synchronous>, transform_indices = @transform_0, window_bounds = array<i64: 16, 512>}, {pipeline_mode = #tpu.pipeline_mode<synchronous>, transform_indices = @transform_1, window_bounds = array<i64: 16, 1>}, {transform_indices = @transform_2, window_bounds = array<i64: 2, 512, 128>}, {transform_indices = @transform_3, window_bounds = array<i64: 1, 128>}, {transform_indices = @transform_4, window_bounds = array<i64: 16, 128>}, {transform_indices = @transform_5, window_bounds = array<i64: 16, 128>}]} {
    %c0 = arith.constant 0 : index
    %c0_0 = arith.constant 0 : index
    %0 = vector.load %arg1[%c0, %c0_0] : memref<16x512xbf16, #tpu.memory_space<vmem>>, vector<16x512xbf16>
    %c0_1 = arith.constant 0 : index
    %c0_2 = arith.constant 0 : index
    %c0_3 = arith.constant 0 : index
    %1 = vector.load %arg3[%c0_1, %c0_2, %c0_3] : memref<2x512x128xbf16, #tpu.memory_space<vmem>>, vector<1x512x128xbf16>
    %2 = vector.shape_cast %1 : vector<1x512x128xbf16> to vector<512x128xbf16>
    %cst = arith.constant dense<0.000000e+00> : vector<16x128xf32>
    %3 = tpu.matmul %0, %2, %cst {dimension_numbers = #tpu.dot_dimension_numbers<[1], [0], [0], [1], [0, 0, 1, 1], [], []>} : vector<16x512xbf16>, vector<512x128xbf16>, vector<16x128xf32> -> vector<16x128xf32>
    %c0_4 = arith.constant 0 : index
    %c0_5 = arith.constant 0 : index
    %4 = vector.load %arg2[%c0_4, %c0_5] : memref<16x1xf32, #tpu.memory_space<vmem>>, vector<16x1xf32>
    %5 = vector.broadcast %4 : vector<16x1xf32> to vector<16x128xf32>
    %6 = arith.mulf %3, %5 : vector<16x128xf32>
    %c0_6 = arith.constant 0 : index
    %c0_7 = arith.constant 0 : index
    %7 = vector.load %arg6[%c0_6, %c0_7] : memref<16x128xf32, #tpu.memory_space<vmem>>, vector<16x128xf32>
    tpu.vector_store %arg6[%c0_6, %c0_7], %6 {strides = array<i32>} : memref<16x128xf32, #tpu.memory_space<vmem>>, vector<16x128xf32>,
    %c1 = arith.constant 1 : index
    %c0_8 = arith.constant 0 : index
    %c0_9 = arith.constant 0 : index
    %8 = vector.load %arg3[%c1, %c0_8, %c0_9] : memref<2x512x128xbf16, #tpu.memory_space<vmem>>, vector<1x512x128xbf16>
    %9 = vector.shape_cast %8 : vector<1x512x128xbf16> to vector<512x128xbf16>
    %cst_10 = arith.constant dense<0.000000e+00> : vector<16x128xf32>
    %10 = tpu.matmul %0, %9, %cst_10 {dimension_numbers = #tpu.dot_dimension_numbers<[1], [0], [0], [1], [0, 0, 1, 1], [], []>} : vector<16x512xbf16>, vector<512x128xbf16>, vector<16x128xf32> -> vector<16x128xf32>
    %c0_11 = arith.constant 0 : index
    %c0_12 = arith.constant 0 : index
    %11 = vector.load %arg4[%c0_11, %c0_12] : memref<1x128xf32, #tpu.memory_space<vmem>>, vector<1x128xf32>
    %12 = vector.broadcast %11 : vector<1x128xf32> to vector<16x128xf32>
    %13 = arith.addf %10, %12 : vector<16x128xf32>
    %c0_13 = arith.constant 0 : index
    %c0_14 = arith.constant 0 : index
    %14 = vector.load %arg5[%c0_13, %c0_14] : memref<16x128xf32, #tpu.memory_space<vmem>>, vector<16x128xf32>
    tpu.vector_store %arg5[%c0_13, %c0_14], %13 {strides = array<i32>} : memref<16x128xf32, #tpu.memory_space<vmem>>, vector<16x128xf32>,
    return
  }
  func.func @transform_0(%arg0: i32) -> (i32, i32) {
    %c0_i32 = arith.constant 0 : i32
    %c0_i32_0 = arith.constant 0 : i32
    %c0_i32_1 = arith.constant 0 : i32
    return %c0_i32, %c0_i32_0 : i32, i32
  }
  func.func @transform_1(%arg0: i32) -> (i32, i32) {
    %c0_i32 = arith.constant 0 : i32
    %c0_i32_0 = arith.constant 0 : i32
    %c0_i32_1 = arith.constant 0 : i32
    return %c0_i32, %c0_i32_0 : i32, i32
  }
  func.func @transform_2(%arg0: i32) -> (i32, i32, i32) {
    %c0_i32 = arith.constant 0 : i32
    %c0_i32_0 = arith.constant 0 : i32
    %c0_i32_1 = arith.constant 0 : i32
    return %c0_i32, %c0_i32_0, %arg0 : i32, i32, i32
  }
  func.func @transform_3(%arg0: i32) -> (i32, i32) {
    %c0_i32 = arith.constant 0 : i32
    %c0_i32_0 = arith.constant 0 : i32
    return %c0_i32, %arg0 : i32, i32
  }
  func.func @transform_4(%arg0: i32) -> (i32, i32) {
    %c0_i32 = arith.constant 0 : i32
    %c0_i32_0 = arith.constant 0 : i32
    return %c0_i32, %arg0 : i32, i32
  }
  func.func @transform_5(%arg0: i32) -> (i32, i32) {
    %c0_i32 = arith.constant 0 : i32
    %c0_i32_0 = arith.constant 0 : i32
    return %c0_i32, %arg0 : i32, i32
  }
}

</mosaic_0001>

<llo_original>
// kernel: tpu_custom_call.1
$region0: #{tpu_custom_call.1}
  #allocation0 [shape = 'u32[]', space=smem, size = 0x4, offset = 0x4, fixed_abs, tag = 'smem constant byte address 0x4 - core index']
  #allocation1 [shape = 'u32[144,128]{1,0:T(1,128)}', space=vmem, size = 0x12000, scoped, tag = 'internal scratch']
  %s0 = inlined_call_operand.hbm [shape: bf16[16,512], index: 0, kind: input, shape index: {}]
  %s1 = inlined_call_operand.vmem [shape: f32[16,1], index: 1, kind: input, shape index: {}]
  %s2 = inlined_call_operand.hbm [shape: bf16[2,512,128], index: 2, kind: input, shape index: {}]
  %s3 = inlined_call_operand.vmem [shape: f32[1,128], index: 3, kind: input, shape index: {}]
  %s4 = inlined_call_operand.hbm [shape: f32[16,128], index: 4, kind: output, shape index: {0}]
  %s5 = inlined_call_operand.hbm [shape: f32[16,128], index: 5, kind: output, shape index: {1}]
  %6 = xla_tuple %s4, %s5
  %s7 = sld [smem:[#allocation0]]
  $region42: #{tpu_custom_call.1} parent=0
    _
  %s9 = ssub.s32 1, %s7
  %s10 = scalar_select 0, %s9, %s7
  $region1: #{tpu_custom_call.1} parent=0
    #allocation2 [shape = 'u8[16384]{0}', space=vmem, size = 0x4000, scoped, tag = 'input window, operand 0, single buffered']
    #allocation3 [shape = 's32[1]{0}', space=sflag, size = 0x4, scoped, tag = 'scoped memory for tpu_custom_call.1']
    #allocation4 [shape = 's32[1]{0}', space=sflag, size = 0x4, scoped, tag = 'scoped memory for tpu_custom_call.1']
    #allocation5 [shape = 'u8[262144]{0}', space=vmem, size = 0x40000, scoped, tag = 'input window, operand 2, single buffered']
    #allocation6 [shape = 's32[1]{0}', space=sflag, size = 0x4, scoped, tag = 'scoped memory for tpu_custom_call.1']
    #allocation7 [shape = 'u8[8192]{0}', space=vmem, size = 0x2000, scoped, tag = 'output window, operand 0, single buffered']
    #allocation8 [shape = 'u8[8192]{0}', space=vmem, size = 0x2000, scoped, tag = 'output window, operand 1, single buffered']
    #allocation9 [shape = 's32[1]{0}', space=sflag, size = 0x4, scoped, tag = 'scoped memory for tpu_custom_call.1']
    %11 = vsyncpa [#allocation3], 0
    %12 = vsyncpa [#allocation6], 0
    %13 = vsyncpa [#allocation4], 0
    %14 = vsyncpa [#allocation9], 0
    // Predicated region
    $region2: #{tpu_custom_call.1} parent=1 // pred_check
      _
    $region3: #{tpu_custom_call.1} parent=1 // pred_check_branch
      %16 = sbr.rel (0) target = $region5
    $region4: #{tpu_custom_call.1} parent=1 // pred_region
      %s18 = ssub.s32 512, 512
      %19 = vsyncadd [#allocation3], %s18
      %s20 = sshll.u32 [#allocation2], 4
      %s21 = int_to_ptr.vmem [resolvable:$true] %s20
      %26 = dma.hbm_to_vmem [thread:$0]  %s0, 512, %s21, [#allocation3], 256, 256, 16
    $region5: #{tpu_custom_call.1} parent=1 // pred_fallthru
      _
    // Predicated region
    $region6: #{tpu_custom_call.1} parent=1 // pred_check
      _
    $region7: #{tpu_custom_call.1} parent=1 // pred_check_branch
      %28 = sbr.rel (0) target = $region9
    $region8: #{tpu_custom_call.1} parent=1 // pred_region
      _
    $region9: #{tpu_custom_call.1} parent=1 // pred_fallthru
      _
    // Predicated region
    $region10: #{tpu_custom_call.1} parent=1 // pred_check
      _
    $region11: #{tpu_custom_call.1} parent=1 // pred_check_branch
      %30 = sbr.rel (0) target = $region13
    $region12: #{tpu_custom_call.1} parent=1 // pred_region
      %s32 = ssub.s32 8192, 8192
      %33 = vsyncadd [#allocation6], %s32
      %s34 = sshll.u32 [#allocation5], 4
      %s35 = int_to_ptr.vmem [resolvable:$true] %s34
      %40 = dma.hbm_to_vmem [thread:$0]  %s2, 8192, %s35, [#allocation6], 64, 64, 4
    $region13: #{tpu_custom_call.1} parent=1 // pred_fallthru
      _
    // Predicated region
    $region14: #{tpu_custom_call.1} parent=1 // pred_check
      _
    $region15: #{tpu_custom_call.1} parent=1 // pred_check_branch
      %42 = sbr.rel (0) target = $region17
    $region16: #{tpu_custom_call.1} parent=1 // pred_region
      _
    $region17: #{tpu_custom_call.1} parent=1 // pred_fallthru
      _
    // Predicated region
    $region18: #{tpu_custom_call.1} parent=1 // pred_check
      _
    $region19: #{tpu_custom_call.1} parent=1 // pred_check_branch
      %44 = sbr.rel (0) target = $region21
    $region20: #{tpu_custom_call.1} parent=1 // pred_region
      %45 = dma.done [#allocation3], 512
    $region21: #{tpu_custom_call.1} parent=1 // pred_fallthru
      _
    // Predicated region
    $region22: #{tpu_custom_call.1} parent=1 // pred_check
      _
    $region23: #{tpu_custom_call.1} parent=1 // pred_check_branch
      %47 = sbr.rel (0) target = $region25
    $region24: #{tpu_custom_call.1} parent=1 // pred_region
      %48 = dma.done [#allocation6], 8192
    $region25: #{tpu_custom_call.1} parent=1 // pred_fallthru
      _
    %v50 = vld [vmem:[#allocation2] sm:$0xff]
    %v51 = vld [vmem:[#allocation2 + $0x8] sm:$0xff]
    %v52 = vld [vmem:[#allocation2 + $0x10] sm:$0xff]
    %v53 = vld [vmem:[#allocation2 + $0x18] sm:$0xff]
    %v54 = vld [vmem:[#allocation5] sm:$0xf]
    %v55 = vld [vmem:[#allocation5 + $0x4] sm:$0xf]
    %v56 = vld [vmem:[#allocation5 + $0x8] sm:$0xf]
    %v57 = vld [vmem:[#allocation5 + $0xc] sm:$0xf]
    %v58 = vld [vmem:[#allocation5 + $0x10] sm:$0xf]
    %v59 = vld [vmem:[#allocation5 + $0x14] sm:$0xf]
    %v60 = vld [vmem:[#allocation5 + $0x18] sm:$0xf]
    %v61 = vld [vmem:[#allocation5 + $0x1c] sm:$0xf]
    %v62 = vld [vmem:[#allocation5 + $0x20] sm:$0xf]
    %v63 = vld [vmem:[#allocation5 + $0x24] sm:$0xf]
    %v64 = vld [vmem:[#allocation5 + $0x28] sm:$0xf]
    %v65 = vld [vmem:[#allocation5 + $0x2c] sm:$0xf]
    %v66 = vld [vmem:[#allocation5 + $0x30] sm:$0xf]
    %v67 = vld [vmem:[#allocation5 + $0x34] sm:$0xf]
    %v68 = vld [vmem:[#allocation5 + $0x38] sm:$0xf]
    %v69 = vld [vmem:[#allocation5 + $0x3c] sm:$0xf]
    %v70 = vld [vmem:[#allocation5 + $0x40] sm:$0xf]
    %v71 = vld [vmem:[#allocation5 + $0x44] sm:$0xf]
    %v72 = vld [vmem:[#allocation5 + $0x48] sm:$0xf]
    %v73 = vld [vmem:[#allocation5 + $0x4c] sm:$0xf]
    %v74 = vld [vmem:[#allocation5 + $0x50] sm:$0xf]
    %v75 = vld [vmem:[#allocation5 + $0x54] sm:$0xf]
    %v76 = vld [vmem:[#allocation5 + $0x58] sm:$0xf]
    %v77 = vld [vmem:[#allocation5 + $0x5c] sm:$0xf]
    %v78 = vld [vmem:[#allocation5 + $0x60] sm:$0xf]
    %v79 = vld [vmem:[#allocation5 + $0x64] sm:$0xf]
    %v80 = vld [vmem:[#allocation5 + $0x68] sm:$0xf]
    %v81 = vld [vmem:[#allocation5 + $0x6c] sm:$0xf]
    %v82 = vld [vmem:[#allocation5 + $0x70] sm:$0xf]
    %v83 = vld [vmem:[#allocation5 + $0x74] sm:$0xf]
    %v84 = vld [vmem:[#allocation5 + $0x78] sm:$0xf]
    %v85 = vld [vmem:[#allocation5 + $0x7c] sm:$0xf]
    %v86 = vld [vmem:[#allocation5 + $0x80] sm:$0xf]
    %v87 = vld [vmem:[#allocation5 + $0x84] sm:$0xf]
    %v88 = vld [vmem:[#allocation5 + $0x88] sm:$0xf]
    %v89 = vld [vmem:[#allocation5 + $0x8c] sm:$0xf]
    %v90 = vld [vmem:[#allocation5 + $0x90] sm:$0xf]
    %v91 = vld [vmem:[#allocation5 + $0x94] sm:$0xf]
    %v92 = vld [vmem:[#allocation5 + $0x98] sm:$0xf]
    %v93 = vld [vmem:[#allocation5 + $0x9c] sm:$0xf]
    %v94 = vld [vmem:[#allocation5 + $0xa0] sm:$0xf]
    %v95 = vld [vmem:[#allocation5 + $0xa4] sm:$0xf]
    %v96 = vld [vmem:[#allocation5 + $0xa8] sm:$0xf]
    %v97 = vld [vmem:[#allocation5 + $0xac] sm:$0xf]
    %v98 = vld [vmem:[#allocation5 + $0xb0] sm:$0xf]
    %v99 = vld [vmem:[#allocation5 + $0xb4] sm:$0xf]
    %v100 = vld [vmem:[#allocation5 + $0xb8] sm:$0xf]
    %v101 = vld [vmem:[#allocation5 + $0xbc] sm:$0xf]
    %v102 = vld [vmem:[#allocation5 + $0xc0] sm:$0xf]
    %v103 = vld [vmem:[#allocation5 + $0xc4] sm:$0xf]
    %v104 = vld [vmem:[#allocation5 + $0xc8] sm:$0xf]
    %v105 = vld [vmem:[#allocation5 + $0xcc] sm:$0xf]
    %v106 = vld [vmem:[#allocation5 + $0xd0] sm:$0xf]
    %v107 = vld [vmem:[#allocation5 + $0xd4] sm:$0xf]
    %v108 = vld [vmem:[#allocation5 + $0xd8] sm:$0xf]
    %v109 = vld [vmem:[#allocation5 + $0xdc] sm:$0xf]
    %v110 = vld [vmem:[#allocation5 + $0xe0] sm:$0xf]
    %v111 = vld [vmem:[#allocation5 + $0xe4] sm:$0xf]
    %v112 = vld [vmem:[#allocation5 + $0xe8] sm:$0xf]
    %v113 = vld [vmem:[#allocation5 + $0xec] sm:$0xf]
    %v114 = vld [vmem:[#allocation5 + $0xf0] sm:$0xf]
    %v115 = vld [vmem:[#allocation5 + $0xf4] sm:$0xf]
    %v116 = vld [vmem:[#allocation5 + $0xf8] sm:$0xf]
    %v117 = vld [vmem:[#allocation5 + $0xfc] sm:$0xf]
    %v122 = vunpack.c.l.b16 %v50
    %v123 = vunpack.c.h.b16 %v50
    %v124 = vunpack.c.l.b16 %v51
    %v125 = vunpack.c.h.b16 %v51
    %v126 = vunpack.c.l.b16 %v52
    %v127 = vunpack.c.h.b16 %v52
    %v128 = vunpack.c.l.b16 %v53
    %v129 = vunpack.c.h.b16 %v53
    %v130 = vpack.c.b16 %v126, %v122
    %v131 = vpack.c.b16 %v127, %v123
    %v132 = vpack.c.b16 %v128, %v124
    %v133 = vpack.c.b16 %v129, %v125
    %v202 = vunpack.c.l.b16 %v54
    %v203 = vunpack.c.l.b16 %v55
    %v204 = vunpack.c.l.b16 %v56
    %v205 = vunpack.c.l.b16 %v57
    %v206 = vunpack.c.l.b16 %v58
    %v207 = vunpack.c.l.b16 %v59
    %v208 = vunpack.c.l.b16 %v60
    %v209 = vunpack.c.l.b16 %v61
    %v210 = vunpack.c.l.b16 %v62
    %v211 = vunpack.c.l.b16 %v63
    %v212 = vunpack.c.l.b16 %v64
    %v213 = vunpack.c.l.b16 %v65
    %v214 = vunpack.c.l.b16 %v66
    %v215 = vunpack.c.l.b16 %v67
    %v216 = vunpack.c.l.b16 %v68
    %v217 = vunpack.c.l.b16 %v69
    %v218 = vunpack.c.l.b16 %v70
    %v219 = vunpack.c.l.b16 %v71
    %v220 = vunpack.c.l.b16 %v72
    %v221 = vunpack.c.l.b16 %v73
    %v222 = vunpack.c.l.b16 %v74
    %v223 = vunpack.c.l.b16 %v75
    %v224 = vunpack.c.l.b16 %v76
    %v225 = vunpack.c.l.b16 %v77
    %v226 = vunpack.c.l.b16 %v78
    %v227 = vunpack.c.l.b16 %v79
    %v228 = vunpack.c.l.b16 %v80
    %v229 = vunpack.c.l.b16 %v81
    %v230 = vunpack.c.l.b16 %v82
    %v231 = vunpack.c.l.b16 %v83
    %v232 = vunpack.c.l.b16 %v84
    %v233 = vunpack.c.l.b16 %v85
    %v234 = vunpack.c.l.b16 %v86
    %v235 = vunpack.c.l.b16 %v87
    %v236 = vunpack.c.l.b16 %v88
    %v237 = vunpack.c.l.b16 %v89
    %v238 = vunpack.c.l.b16 %v90
    %v239 = vunpack.c.l.b16 %v91
    %v240 = vunpack.c.l.b16 %v92
    %v241 = vunpack.c.l.b16 %v93
    %v242 = vunpack.c.l.b16 %v94
    %v243 = vunpack.c.l.b16 %v95
    %v244 = vunpack.c.l.b16 %v96
    %v245 = vunpack.c.l.b16 %v97
    %v246 = vunpack.c.l.b16 %v98
    %v247 = vunpack.c.l.b16 %v99
    %v248 = vunpack.c.l.b16 %v100
    %v249 = vunpack.c.l.b16 %v101
    %v250 = vunpack.c.l.b16 %v102
    %v251 = vunpack.c.l.b16 %v103
    %v252 = vunpack.c.l.b16 %v104
    %v253 = vunpack.c.l.b16 %v105
    %v254 = vunpack.c.l.b16 %v106
    %v255 = vunpack.c.l.b16 %v107
    %v256 = vunpack.c.l.b16 %v108
    %v257 = vunpack.c.l.b16 %v109
    %v258 = vunpack.c.l.b16 %v110
    %v259 = vunpack.c.l.b16 %v111
    %v260 = vunpack.c.l.b16 %v112
    %v261 = vunpack.c.l.b16 %v113
    %v262 = vunpack.c.l.b16 %v114
    %v263 = vunpack.c.l.b16 %v115
    %v264 = vunpack.c.l.b16 %v116
    %v265 = vunpack.c.l.b16 %v117
    %v266 = vpack.c.b16 %v203, %v202
    %v267 = vpack.c.b16 %v205, %v204
    %v268 = vpack.c.b16 %v207, %v206
    %v269 = vpack.c.b16 %v209, %v208
    %v270 = vpack.c.b16 %v211, %v210
    %v271 = vpack.c.b16 %v213, %v212
    %v272 = vpack.c.b16 %v215, %v214
    %v273 = vpack.c.b16 %v217, %v216
    %v274 = vpack.c.b16 %v219, %v218
    %v275 = vpack.c.b16 %v221, %v220
    %v276 = vpack.c.b16 %v223, %v222
    %v277 = vpack.c.b16 %v225, %v224
    %v278 = vpack.c.b16 %v227, %v226
    %v279 = vpack.c.b16 %v229, %v228
    %v280 = vpack.c.b16 %v231, %v230
    %v281 = vpack.c.b16 %v233, %v232
    %v282 = vpack.c.b16 %v235, %v234
    %v283 = vpack.c.b16 %v237, %v236
    %v284 = vpack.c.b16 %v239, %v238
    %v285 = vpack.c.b16 %v241, %v240
    %v286 = vpack.c.b16 %v243, %v242
    %v287 = vpack.c.b16 %v245, %v244
    %v288 = vpack.c.b16 %v247, %v246
    %v289 = vpack.c.b16 %v249, %v248
    %v290 = vpack.c.b16 %v251, %v250
    %v291 = vpack.c.b16 %v253, %v252
    %v292 = vpack.c.b16 %v255, %v254
    %v293 = vpack.c.b16 %v257, %v256
    %v294 = vpack.c.b16 %v259, %v258
    %v295 = vpack.c.b16 %v261, %v260
    %v296 = vpack.c.b16 %v263, %v262
    %v297 = vpack.c.b16 %v265, %v264
    %330 = vmatprep.subr.bf16.mxu0 0
    %331 = vmatpush1.bf16.msra.mxu0 %v266
    %332 = vmatprep.subr.bf16.mxu0 0
    %333 = vmatpush1.bf16.msra.mxu0 %v267
    %334 = vmatprep.subr.bf16.mxu0 0
    %335 = vmatpush1.bf16.msra.mxu0 %v268
    %336 = vmatprep.subr.bf16.mxu0 0
    %337 = vmatpush1.bf16.msra.mxu0 %v269
    %338 = vmatprep.subr.bf16.mxu0 0
    %339 = vmatpush1.bf16.msra.mxu0 %v270
    %340 = vmatprep.subr.bf16.mxu0 0
    %341 = vmatpush1.bf16.msra.mxu0 %v271
    %342 = vmatprep.subr.bf16.mxu0 0
    %343 = vmatpush1.bf16.msra.mxu0 %v272
    %344 = vmatprep.subr.bf16.mxu0 0
    %345 = vmatpush1.bf16.msra.mxu0 %v273
    %346 = vmatprep.subr.bf16.mxu0 0
    %347 = vmatpush1.bf16.msra.mxu0 %v274
    %348 = vmatprep.subr.bf16.mxu0 0
    %349 = vmatpush1.bf16.msra.mxu0 %v275
    %350 = vmatprep.subr.bf16.mxu0 0
    %351 = vmatpush1.bf16.msra.mxu0 %v276
    %352 = vmatprep.subr.bf16.mxu0 0
    %353 = vmatpush1.bf16.msra.mxu0 %v277
    %354 = vmatprep.subr.bf16.mxu0 0
    %355 = vmatpush1.bf16.msra.mxu0 %v278
    %356 = vmatprep.subr.bf16.mxu0 0
    %357 = vmatpush1.bf16.msra.mxu0 %v279
    %358 = vmatprep.subr.bf16.mxu0 0
    %359 = vmatpush1.bf16.msra.mxu0 %v280
    %360 = vmatprep.subr.bf16.mxu0 0
    %361 = vmatpush1.bf16.msra.mxu0 %v281
    %362 = vmatprep.mubr.bf16.mxu0 %v131
    %363 = vmatmul.mubr.bf16.gmra.mrb[0].mxu0 %v130
    %v364 = vpop.f32.mrb[0].mxu0
    %v365 = vadd.f32 0.0, %v364
    %v366 = vpop.f32.mrb[0].mxu0
    %v367 = vpop.f32.mrb[0].mxu0
    %v368 = vadd.f32 0.0, %v367
    %v369 = vpop.f32.mrb[0].mxu0
    %370 = vdwg.mxu0
    %371 = vmatprep.subr.bf16.mxu0 0
    %372 = vmatpush1.bf16.msra.mxu0 %v282
    %373 = vmatprep.subr.bf16.mxu0 0
    %374 = vmatpush1.bf16.msra.mxu0 %v283
    %375 = vmatprep.subr.bf16.mxu0 0
    %376 = vmatpush1.bf16.msra.mxu0 %v284
    %377 = vmatprep.subr.bf16.mxu0 0
    %378 = vmatpush1.bf16.msra.mxu0 %v285
    %379 = vmatprep.subr.bf16.mxu0 0
    %380 = vmatpush1.bf16.msra.mxu0 %v286
    %381 = vmatprep.subr.bf16.mxu0 0
    %382 = vmatpush1.bf16.msra.mxu0 %v287
    %383 = vmatprep.subr.bf16.mxu0 0
    %384 = vmatpush1.bf16.msra.mxu0 %v288
    %385 = vmatprep.subr.bf16.mxu0 0
    %386 = vmatpush1.bf16.msra.mxu0 %v289
    %387 = vmatprep.subr.bf16.mxu0 0
    %388 = vmatpush1.bf16.msra.mxu0 %v290
    %389 = vmatprep.subr.bf16.mxu0 0
    %390 = vmatpush1.bf16.msra.mxu0 %v291
    %391 = vmatprep.subr.bf16.mxu0 0
    %392 = vmatpush1.bf16.msra.mxu0 %v292
    %393 = vmatprep.subr.bf16.mxu0 0
    %394 = vmatpush1.bf16.msra.mxu0 %v293
    %395 = vmatprep.subr.bf16.mxu0 0
    %396 = vmatpush1.bf16.msra.mxu0 %v294
    %397 = vmatprep.subr.bf16.mxu0 0
    %398 = vmatpush1.bf16.msra.mxu0 %v295
    %399 = vmatprep.subr.bf16.mxu0 0
    %400 = vmatpush1.bf16.msra.mxu0 %v296
    %401 = vmatprep.subr.bf16.mxu0 0
    %402 = vmatpush1.bf16.msra.mxu0 %v297
    %403 = vmatprep.mubr.bf16.mxu0 %v133
    %404 = vmatmul.mubr.bf16.gmra.mrb[0].mxu0 %v132
    %v405 = vpop.f32.mrb[0].mxu0
    %v406 = vadd.f32 %v365, %v405
    %v407 = vpop.f32.mrb[0].mxu0
    %v408 = vpop.f32.mrb[0].mxu0
    %v409 = vadd.f32 %v368, %v408
    %v410 = vpop.f32.mrb[0].mxu0
    %411 = vdwg.mxu0
    %v412 = vld [vmem:[%s1] sm:$0xff]
    %v413 = vld [vmem:[%s1 + $0x8] sm:$0xff]
    %415 = vset.pattern.permute.xlu0 0
    %416 = vperm.xlu0 %415, %v412
    %v417 = vpop.permute.xlu0 %416
    %420 = vset.pattern.permute.xlu0 0
    %421 = vperm.xlu0 %420, %v413
    %v422 = vpop.permute.xlu0 %421
    %v424 = vmul.f32 %v406, %v417
    %v425 = vmul.f32 %v409, %v422
    %426 = vst [vmem:[#allocation8] sm:$0xff] %v424
    %427 = vst [vmem:[#allocation8 + $0x8] sm:$0xff] %v425
    %s428 = scalar_lea.vmem [#allocation5], 256
    %v429 = vld [vmem:[%s428] sm:$0xf]
    %v430 = vld [vmem:[%s428 + $0x4] sm:$0xf]
    %v431 = vld [vmem:[%s428 + $0x8] sm:$0xf]
    %v432 = vld [vmem:[%s428 + $0xc] sm:$0xf]
    %v433 = vld [vmem:[%s428 + $0x10] sm:$0xf]
    %v434 = vld [vmem:[%s428 + $0x14] sm:$0xf]
    %v435 = vld [vmem:[%s428 + $0x18] sm:$0xf]
    %v436 = vld [vmem:[%s428 + $0x1c] sm:$0xf]
    %v437 = vld [vmem:[%s428 + $0x20] sm:$0xf]
    %v438 = vld [vmem:[%s428 + $0x24] sm:$0xf]
    %v439 = vld [vmem:[%s428 + $0x28] sm:$0xf]
    %v440 = vld [vmem:[%s428 + $0x2c] sm:$0xf]
    %v441 = vld [vmem:[%s428 + $0x30] sm:$0xf]
    %v442 = vld [vmem:[%s428 + $0x34] sm:$0xf]
    %v443 = vld [vmem:[%s428 + $0x38] sm:$0xf]
    %v444 = vld [vmem:[%s428 + $0x3c] sm:$0xf]
    %v445 = vld [vmem:[%s428 + $0x40] sm:$0xf]
    %v446 = vld [vmem:[%s428 + $0x44] sm:$0xf]
    %v447 = vld [vmem:[%s428 + $0x48] sm:$0xf]
    %v448 = vld [vmem:[%s428 + $0x4c] sm:$0xf]
    %v449 = vld [vmem:[%s428 + $0x50] sm:$0xf]
    %v450 = vld [vmem:[%s428 + $0x54] sm:$0xf]
    %v451 = vld [vmem:[%s428 + $0x58] sm:$0xf]
    %v452 = vld [vmem:[%s428 + $0x5c] sm:$0xf]
    %v453 = vld [vmem:[%s428 + $0x60] sm:$0xf]
    %v454 = vld [vmem:[%s428 + $0x64] sm:$0xf]
    %v455 = vld [vmem:[%s428 + $0x68] sm:$0xf]
    %v456 = vld [vmem:[%s428 + $0x6c] sm:$0xf]
    %v457 = vld [vmem:[%s428 + $0x70] sm:$0xf]
    %v458 = vld [vmem:[%s428 + $0x74] sm:$0xf]
    %v459 = vld [vmem:[%s428 + $0x78] sm:$0xf]
    %v460 = vld [vmem:[%s428 + $0x7c] sm:$0xf]
    %v461 = vld [vmem:[%s428 + $0x80] sm:$0xf]
    %v462 = vld [vmem:[%s428 + $0x84] sm:$0xf]
    %v463 = vld [vmem:[%s428 + $0x88] sm:$0xf]
    %v464 = vld [vmem:[%s428 + $0x8c] sm:$0xf]
    %v465 = vld [vmem:[%s428 + $0x90] sm:$0xf]
    %v466 = vld [vmem:[%s428 + $0x94] sm:$0xf]
    %v467 = vld [vmem:[%s428 + $0x98] sm:$0xf]
    %v468 = vld [vmem:[%s428 + $0x9c] sm:$0xf]
    %v469 = vld [vmem:[%s428 + $0xa0] sm:$0xf]
    %v470 = vld [vmem:[%s428 + $0xa4] sm:$0xf]
    %v471 = vld [vmem:[%s428 + $0xa8] sm:$0xf]
    %v472 = vld [vmem:[%s428 + $0xac] sm:$0xf]
    %v473 = vld [vmem:[%s428 + $0xb0] sm:$0xf]
    %v474 = vld [vmem:[%s428 + $0xb4] sm:$0xf]
    %v475 = vld [vmem:[%s428 + $0xb8] sm:$0xf]
    %v476 = vld [vmem:[%s428 + $0xbc] sm:$0xf]
    %v477 = vld [vmem:[%s428 + $0xc0] sm:$0xf]
    %v478 = vld [vmem:[%s428 + $0xc4] sm:$0xf]
    %v479 = vld [vmem:[%s428 + $0xc8] sm:$0xf]
    %v480 = vld [vmem:[%s428 + $0xcc] sm:$0xf]
    %v481 = vld [vmem:[%s428 + $0xd0] sm:$0xf]
    %v482 = vld [vmem:[%s428 + $0xd4] sm:$0xf]
    %v483 = vld [vmem:[%s428 + $0xd8] sm:$0xf]
    %v484 = vld [vmem:[%s428 + $0xdc] sm:$0xf]
    %v485 = vld [vmem:[%s428 + $0xe0] sm:$0xf]
    %v486 = vld [vmem:[%s428 + $0xe4] sm:$0xf]
    %v487 = vld [vmem:[%s428 + $0xe8] sm:$0xf]
    %v488 = vld [vmem:[%s428 + $0xec] sm:$0xf]
    %v489 = vld [vmem:[%s428 + $0xf0] sm:$0xf]
    %v490 = vld [vmem:[%s428 + $0xf4] sm:$0xf]
    %v491 = vld [vmem:[%s428 + $0xf8] sm:$0xf]
    %v492 = vld [vmem:[%s428 + $0xfc] sm:$0xf]
    %v493 = vld [vmem:[%s3] sm:$0x1]
    %v495 = vlaneseq
    %v496 = vshrl.u32 %v495, 7
    %v497 = vsub.s32 0, %v496
    %v498 = vrot.slane %v493, %v497
    %v564 = vunpack.c.l.b16 %v429
    %v565 = vunpack.c.l.b16 %v430
    %v566 = vunpack.c.l.b16 %v431
    %v567 = vunpack.c.l.b16 %v432
    %v568 = vunpack.c.l.b16 %v433
    %v569 = vunpack.c.l.b16 %v434
    %v570 = vunpack.c.l.b16 %v435
    %v571 = vunpack.c.l.b16 %v436
    %v572 = vunpack.c.l.b16 %v437
    %v573 = vunpack.c.l.b16 %v438
    %v574 = vunpack.c.l.b16 %v439
    %v575 = vunpack.c.l.b16 %v440
    %v576 = vunpack.c.l.b16 %v441
    %v577 = vunpack.c.l.b16 %v442
    %v578 = vunpack.c.l.b16 %v443
    %v579 = vunpack.c.l.b16 %v444
    %v580 = vunpack.c.l.b16 %v445
    %v581 = vunpack.c.l.b16 %v446
    %v582 = vunpack.c.l.b16 %v447
    %v583 = vunpack.c.l.b16 %v448
    %v584 = vunpack.c.l.b16 %v449
    %v585 = vunpack.c.l.b16 %v450
    %v586 = vunpack.c.l.b16 %v451
    %v587 = vunpack.c.l.b16 %v452
    %v588 = vunpack.c.l.b16 %v453
    %v589 = vunpack.c.l.b16 %v454
    %v590 = vunpack.c.l.b16 %v455
    %v591 = vunpack.c.l.b16 %v456
    %v592 = vunpack.c.l.b16 %v457
    %v593 = vunpack.c.l.b16 %v458
    %v594 = vunpack.c.l.b16 %v459
    %v595 = vunpack.c.l.b16 %v460
    %v596 = vunpack.c.l.b16 %v461
    %v597 = vunpack.c.l.b16 %v462
    %v598 = vunpack.c.l.b16 %v463
    %v599 = vunpack.c.l.b16 %v464
    %v600 = vunpack.c.l.b16 %v465
    %v601 = vunpack.c.l.b16 %v466
    %v602 = vunpack.c.l.b16 %v467
    %v603 = vunpack.c.l.b16 %v468
    %v604 = vunpack.c.l.b16 %v469
    %v605 = vunpack.c.l.b16 %v470
    %v606 = vunpack.c.l.b16 %v471
    %v607 = vunpack.c.l.b16 %v472
    %v608 = vunpack.c.l.b16 %v473
    %v609 = vunpack.c.l.b16 %v474
    %v610 = vunpack.c.l.b16 %v475
    %v611 = vunpack.c.l.b16 %v476
    %v612 = vunpack.c.l.b16 %v477
    %v613 = vunpack.c.l.b16 %v478
    %v614 = vunpack.c.l.b16 %v479
    %v615 = vunpack.c.l.b16 %v480
    %v616 = vunpack.c.l.b16 %v481
    %v617 = vunpack.c.l.b16 %v482
    %v618 = vunpack.c.l.b16 %v483
    %v619 = vunpack.c.l.b16 %v484
    %v620 = vunpack.c.l.b16 %v485
    %v621 = vunpack.c.l.b16 %v486
    %v622 = vunpack.c.l.b16 %v487
    %v623 = vunpack.c.l.b16 %v488
    %v624 = vunpack.c.l.b16 %v489
    %v625 = vunpack.c.l.b16 %v490
    %v626 = vunpack.c.l.b16 %v491
    %v627 = vunpack.c.l.b16 %v492
    %v628 = vpack.c.b16 %v565, %v564
    %v629 = vpack.c.b16 %v567, %v566
    %v630 = vpack.c.b16 %v569, %v568
    %v631 = vpack.c.b16 %v571, %v570
    %v632 = vpack.c.b16 %v573, %v572
    %v633 = vpack.c.b16 %v575, %v574
    %v634 = vpack.c.b16 %v577, %v576
    %v635 = vpack.c.b16 %v579, %v578
    %v636 = vpack.c.b16 %v581, %v580
    %v637 = vpack.c.b16 %v583, %v582
    %v638 = vpack.c.b16 %v585, %v584
    %v639 = vpack.c.b16 %v587, %v586
    %v640 = vpack.c.b16 %v589, %v588
    %v641 = vpack.c.b16 %v591, %v590
    %v642 = vpack.c.b16 %v593, %v592
    %v643 = vpack.c.b16 %v595, %v594
    %v644 = vpack.c.b16 %v597, %v596
    %v645 = vpack.c.b16 %v599, %v598
    %v646 = vpack.c.b16 %v601, %v600
    %v647 = vpack.c.b16 %v603, %v602
    %v648 = vpack.c.b16 %v605, %v604
    %v649 = vpack.c.b16 %v607, %v606
    %v650 = vpack.c.b16 %v609, %v608
    %v651 = vpack.c.b16 %v611, %v610
    %v652 = vpack.c.b16 %v613, %v612
    %v653 = vpack.c.b16 %v615, %v614
    %v654 = vpack.c.b16 %v617, %v616
    %v655 = vpack.c.b16 %v619, %v618
    %v656 = vpack.c.b16 %v621, %v620
    %v657 = vpack.c.b16 %v623, %v622
    %v658 = vpack.c.b16 %v625, %v624
    %v659 = vpack.c.b16 %v627, %v626
    %692 = vmatprep.subr.bf16.mxu0 0
    %693 = vmatpush1.bf16.msra.mxu0 %v628
    %694 = vmatprep.subr.bf16.mxu0 0
    %695 = vmatpush1.bf16.msra.mxu0 %v629
    %696 = vmatprep.subr.bf16.mxu0 0
    %697 = vmatpush1.bf16.msra.mxu0 %v630
    %698 = vmatprep.subr.bf16.mxu0 0
    %699 = vmatpush1.bf16.msra.mxu0 %v631
    %700 = vmatprep.subr.bf16.mxu0 0
    %701 = vmatpush1.bf16.msra.mxu0 %v632
    %702 = vmatprep.subr.bf16.mxu0 0
    %703 = vmatpush1.bf16.msra.mxu0 %v633
    %704 = vmatprep.subr.bf16.mxu0 0
    %705 = vmatpush1.bf16.msra.mxu0 %v634
    %706 = vmatprep.subr.bf16.mxu0 0
    %707 = vmatpush1.bf16.msra.mxu0 %v635
    %708 = vmatprep.subr.bf16.mxu0 0
    %709 = vmatpush1.bf16.msra.mxu0 %v636
    %710 = vmatprep.subr.bf16.mxu0 0
    %711 = vmatpush1.bf16.msra.mxu0 %v637
    %712 = vmatprep.subr.bf16.mxu0 0
    %713 = vmatpush1.bf16.msra.mxu0 %v638
    %714 = vmatprep.subr.bf16.mxu0 0
    %715 = vmatpush1.bf16.msra.mxu0 %v639
    %716 = vmatprep.subr.bf16.mxu0 0
    %717 = vmatpush1.bf16.msra.mxu0 %v640
    %718 = vmatprep.subr.bf16.mxu0 0
    %719 = vmatpush1.bf16.msra.mxu0 %v641
    %720 = vmatprep.subr.bf16.mxu0 0
    %721 = vmatpush1.bf16.msra.mxu0 %v642
    %722 = vmatprep.subr.bf16.mxu0 0
    %723 = vmatpush1.bf16.msra.mxu0 %v643
    %724 = vmatprep.mubr.bf16.mxu0 %v131
    %725 = vmatmul.mubr.bf16.gmra.mrb[0].mxu0 %v130
    %v726 = vpop.f32.mrb[0].mxu0
    %v727 = vadd.f32 %v498, %v726
    %v728 = vpop.f32.mrb[0].mxu0
    %v729 = vpop.f32.mrb[0].mxu0
    %v730 = vadd.f32 %v498, %v729
    %v731 = vpop.f32.mrb[0].mxu0
    %732 = vdwg.mxu0
    %733 = vmatprep.subr.bf16.mxu0 0
    %734 = vmatpush1.bf16.msra.mxu0 %v644
    %735 = vmatprep.subr.bf16.mxu0 0
    %736 = vmatpush1.bf16.msra.mxu0 %v645
    %737 = vmatprep.subr.bf16.mxu0 0
    %738 = vmatpush1.bf16.msra.mxu0 %v646
    %739 = vmatprep.subr.bf16.mxu0 0
    %740 = vmatpush1.bf16.msra.mxu0 %v647
    %741 = vmatprep.subr.bf16.mxu0 0
    %742 = vmatpush1.bf16.msra.mxu0 %v648
    %743 = vmatprep.subr.bf16.mxu0 0
    %744 = vmatpush1.bf16.msra.mxu0 %v649
    %745 = vmatprep.subr.bf16.mxu0 0
    %746 = vmatpush1.bf16.msra.mxu0 %v650
    %747 = vmatprep.subr.bf16.mxu0 0
    %748 = vmatpush1.bf16.msra.mxu0 %v651
    %749 = vmatprep.subr.bf16.mxu0 0
    %750 = vmatpush1.bf16.msra.mxu0 %v652
    %751 = vmatprep.subr.bf16.mxu0 0
    %752 = vmatpush1.bf16.msra.mxu0 %v653
    %753 = vmatprep.subr.bf16.mxu0 0
    %754 = vmatpush1.bf16.msra.mxu0 %v654
    %755 = vmatprep.subr.bf16.mxu0 0
    %756 = vmatpush1.bf16.msra.mxu0 %v655
    %757 = vmatprep.subr.bf16.mxu0 0
    %758 = vmatpush1.bf16.msra.mxu0 %v656
    %759 = vmatprep.subr.bf16.mxu0 0
    %760 = vmatpush1.bf16.msra.mxu0 %v657
    %761 = vmatprep.subr.bf16.mxu0 0
    %762 = vmatpush1.bf16.msra.mxu0 %v658
    %763 = vmatprep.subr.bf16.mxu0 0
    %764 = vmatpush1.bf16.msra.mxu0 %v659
    %765 = vmatprep.mubr.bf16.mxu0 %v133
    %766 = vmatmul.mubr.bf16.gmra.mrb[0].mxu0 %v132
    %v767 = vpop.f32.mrb[0].mxu0
    %v768 = vadd.f32 %v727, %v767
    %v769 = vpop.f32.mrb[0].mxu0
    %v770 = vpop.f32.mrb[0].mxu0
    %v771 = vadd.f32 %v730, %v770
    %v772 = vpop.f32.mrb[0].mxu0
    %773 = vdwg.mxu0
    %774 = vst [vmem:[#allocation7] sm:$0xff] %v768
    %775 = vst [vmem:[#allocation7 + $0x8] sm:$0xff] %v771
    // Predicated region
    $region26: #{tpu_custom_call.1} parent=1 // pred_check
      _
    $region27: #{tpu_custom_call.1} parent=1 // pred_check_branch
      %777 = sbr.rel (0) target = $region29
    $region28: #{tpu_custom_call.1} parent=1 // pred_region
      %s779 = ssub.s32 256, 256
      %780 = vsyncadd [#allocation4], %s779
      %s781 = sshll.u32 [#allocation7], 4
      %s782 = int_to_ptr.vmem [resolvable:$true] %s781
      %787 = dma.vmem_to_hbm [thread:$0]  %s782, 256, %s4, [#allocation4], 128, 128, 8
    $region29: #{tpu_custom_call.1} parent=1 // pred_fallthru
      _
    // Predicated region
    $region30: #{tpu_custom_call.1} parent=1 // pred_check
      _
    $region31: #{tpu_custom_call.1} parent=1 // pred_check_branch
      %789 = sbr.rel (0) target = $region33
    $region32: #{tpu_custom_call.1} parent=1 // pred_region
      %s791 = ssub.s32 256, 256
      %792 = vsyncadd [#allocation9], %s791
      %s793 = sshll.u32 [#allocation8], 4
      %s794 = int_to_ptr.vmem [resolvable:$true] %s793
      %799 = dma.vmem_to_hbm [thread:$0]  %s794, 256, %s5, [#allocation9], 128, 128, 8
    $region33: #{tpu_custom_call.1} parent=1 // pred_fallthru
      _
    // Predicated region
    $region34: #{tpu_custom_call.1} parent=1 // pred_check
      _
    $region35: #{tpu_custom_call.1} parent=1 // pred_check_branch
      %801 = sbr.rel (0) target = $region37
    $region36: #{tpu_custom_call.1} parent=1 // pred_region
      %802 = dma.done [#allocation4], 256
    $region37: #{tpu_custom_call.1} parent=1 // pred_fallthru
      _
    // Predicated region
    $region38: #{tpu_custom_call.1} parent=1 // pred_check
      _
    $region39: #{tpu_custom_call.1} parent=1 // pred_check_branch
      %804 = sbr.rel (0) target = $region41
    $region40: #{tpu_custom_call.1} parent=1 // pred_region
      %805 = dma.done [#allocation9], 256
    $region41: #{tpu_custom_call.1} parent=1 // pred_fallthru
      _
    %806 = vsyncpa [#allocation3], 1
    %807 = vsyncpa [#allocation6], 1
    %808 = vsyncpa [#allocation4], 1
    %809 = vsyncpa [#allocation9], 1

</llo_original>
